<compile_context>
chip_gen: v7x
topology: tpu7x:2x2x1
jax: 0.10.0
libtpu: 0.0.40
codegen_flags: <defaults>
</compile_context>

<pallas_src>
from functools import partial

import jax
import jax.numpy as jnp
from jax.experimental import pallas as pl
from jax.experimental.pallas import tpu as pltpu

EPS = 1e-5            # torch.nn.InstanceNorm2d default eps
SUBLANE_BF16 = 16     # bf16 sublane tile (rows per vreg)


def conv_in_relu_kernel(x_ref, w_ref, o_ref, xpad_ref, slab_ref,
                        *, H, W, KH, KW, Cin_pad, Cout, Nb):
    # x_ref:    (Nb, Cin_pad, H*W)        bf16, spatial flattened (lane-dense)
    # w_ref:    (Cout, KH*KW*Cin_pad)     bf16, im2col row order (kh, kw, ci)
    # o_ref:    (Nb, Cout, H*W)           f32 output, NCHW-compatible
    # xpad_ref: (Nb, Cin_pad, H*W + 2*P)  bf16 VMEM scratch, flat zero-padded input
    # slab_ref: (KH*KW*Cin_pad, Nb*H*W)   bf16 VMEM scratch, im2col slab
    HW = H * W
    ph, pw = (KH - 1) // 2, (KW - 1) // 2
    P = ph * W + pw  # flat pad length covering the largest tap shift

    # Zero only the two pad strips; the interior is fully overwritten below.
    xpad_ref[:, :, 0:P] = jnp.zeros((Nb, Cin_pad, P), xpad_ref.dtype)
    xpad_ref[:, :, P + HW:] = jnp.zeros((Nb, Cin_pad, P), xpad_ref.dtype)
    xpad_ref[:, :, P:P + HW] = x_ref[...]

    # Hoisted column-boundary masks: one iota/compare per distinct dw != 0
    # (the flat zero pad already supplies zeros for out-of-range rows).
    lane = jax.lax.broadcasted_iota(jnp.int32, (1, HW), 1)
    col = lane % W
    col_ok = {dw: (col + dw >= 0) & (col + dw < W)
              for dw in range(-pw, pw + 1) if dw != 0}

    # Build the (K, Nb*HW) im2col slab: one lane-shifted slice per (tap, n).
    # Row groups start at multiples of Cin_pad (= bf16 sublane tile) and lane
    # offsets at multiples of HW (multiple of 128) -> unmasked stores.
    for n in range(Nb):
        for kh in range(KH):
            dh = kh - ph
            for kw in range(KW):
                dw = kw - pw
                off = dh * W + dw + P                    # static offset in [0, 2P]
                piece = xpad_ref[n, :, off:off + HW]     # (Cin_pad, HW) bf16
                if dw != 0:
                    piece = jnp.where(col_ok[dw], piece, jnp.zeros_like(piece))
                r = (kh * KW + kw) * Cin_pad
                slab_ref[r:r + Cin_pad, n * HW:(n + 1) * HW] = piece

    # One fused MXU matmul, bf16 operands, f32 accumulation.
    acc = jnp.dot(w_ref[...], slab_ref[...],
                  preferred_element_type=jnp.float32)    # (Cout, Nb*HW) f32

    # InstanceNorm2d(affine=False) per (n, c): single-pass sum / sum-of-squares
    # over the 128-aligned per-image lane segment, all in f32.  Then ReLU and a
    # lane-dense store straight into the NCHW(-flattened) output.
    inv_hw = 1.0 / HW
    for n in range(Nb):
        seg = acc[:, n * HW:(n + 1) * HW]                              # (Cout, HW)
        mean = jnp.sum(seg, axis=1, keepdims=True) * inv_hw
        ex2 = jnp.sum(seg * seg, axis=1, keepdims=True) * inv_hw
        var = ex2 - mean * mean
        y = (seg - mean) * jax.lax.rsqrt(var + EPS)
        o_ref[n] = jnp.maximum(y, 0.0).astype(o_ref.dtype)


def _pick_batch_tile(N, cap=8):
    # Largest divisor of N (<= cap) that still leaves a grid of length >= 2,
    # so v7x's two TensorCores can both get work via dimension_semantics.
    if N <= 1:
        return 1
    best = 1
    for nb in range(1, min(cap, N) + 1):
        if N % nb == 0 and N // nb >= 2:
            best = nb
    return best


def conv_bn_relu(x_nchw, w_oihw, b=None, *, stride=1):
    # `b` accepted for API parity with nn.Conv2d but unused: the per-channel
    # bias is cancelled exactly by the affine-free InstanceNorm's mean subtraction.
    del b
    assert stride == 1, "only stride=1 (module default) implemented"
    N, Cin, H, W = x_nchw.shape
    Cout, Cin_w, KH, KW = w_oihw.shape
    assert Cin_w == Cin
    assert KH % 2 == 1 and KW % 2 == 1, \
        "padding=(k-1)//2 only matches SAME padding for odd kernel sizes"
    ph, pw = (KH - 1) // 2, (KW - 1) // 2
    HW = H * W
    P = ph * W + pw

    # Pad Cin to the bf16 sublane tile so slab row groups are store-aligned.
    Cin_pad = ((Cin + SUBLANE_BF16 - 1) // SUBLANE_BF16) * SUBLANE_BF16
    K_pad = KH * KW * Cin_pad
    Nb = _pick_batch_tile(N)

    # Free (bitcast) reshape NCHW -> (N, Cin, H*W); zero-pad channels (tiny,
    # one-time XLA op; no-op when Cin is already a tile multiple); carry
    # activations through HBM in bf16 (the matmul operands are bf16 anyway).
    x_flat = x_nchw.reshape(N, Cin, HW)
    if Cin_pad != Cin:
        x_flat = jnp.pad(x_flat, ((0, 0), (0, Cin_pad - Cin), (0, 0)))
    x_flat = x_flat.astype(jnp.bfloat16)

    # Weight relayout to (Cout, KH*KW*Cin_pad), row order (kh, kw, ci) matching
    # the slab, with zero columns for the padded channels.  Weights are KB-scale.
    w_t = jnp.transpose(w_oihw, (0, 2, 3, 1))            # (Cout, KH, KW, Cin)
    if Cin_pad != Cin:
        w_t = jnp.pad(w_t, ((0, 0), (0, 0), (0, 0), (0, Cin_pad - Cin)))
    w2d = w_t.reshape(Cout, K_pad).astype(jnp.bfloat16)

    kern = partial(conv_in_relu_kernel, H=H, W=W, KH=KH, KW=KW,
                   Cin_pad=Cin_pad, Cout=Cout, Nb=Nb)

    out_flat = pl.pallas_call(
        kern,
        out_shape=jax.ShapeDtypeStruct((N, Cout, HW), jnp.float32),
        grid_spec=pltpu.PrefetchScalarGridSpec(
            num_scalar_prefetch=0,
            grid=(N // Nb,),
            in_specs=[
                pl.BlockSpec((Nb, Cin_pad, HW), lambda g: (g, 0, 0)),
                pl.BlockSpec((Cout, K_pad), lambda g: (0, 0)),
            ],
            out_specs=pl.BlockSpec((Nb, Cout, HW), lambda g: (g, 0, 0)),
            scratch_shapes=[
                pltpu.VMEM((Nb, Cin_pad, HW + 2 * P), jnp.bfloat16),  # padded input
                pltpu.VMEM((K_pad, Nb * HW), jnp.bfloat16),           # im2col slab
            ],
        ),
        compiler_params=pltpu.CompilerParams(dimension_semantics=("parallel",)),
    )(x_flat, w2d)

    # Free reshape back to NCHW (no HBM transpose).
    return out_flat.reshape(N, Cout, H, W)


def _reference(x_nchw, w_oihw, b):
    # Pure-JAX f32 reference of conv(+bias) -> InstanceNorm2d -> ReLU.
    y = jax.lax.conv_general_dilated(
        x_nchw.astype(jnp.float32), w_oihw.astype(jnp.float32),
        window_strides=(1, 1), padding="SAME",
        dimension_numbers=("NCHW", "OIHW", "NCHW"),
        precision=jax.lax.Precision.HIGHEST)
    y = y + b.astype(jnp.float32)[None, :, None, None]
    mean = y.mean(axis=(2, 3), keepdims=True)
    var = ((y - mean) ** 2).mean(axis=(2, 3), keepdims=True)
    y = (y - mean) / jnp.sqrt(var + EPS)
    return jnp.maximum(y, 0.0)


if __name__ == "__main__":
    # Small shapes consistent with the module: NCHW input, 3x3 conv stride 1.
    N, Cin, H, W = 2, 4, 16, 16
    Cout, Ksz = 8, 3

    key = jax.random.PRNGKey(0)
    kx, kw, kb = jax.random.split(key, 3)
    x = jax.random.normal(kx, (N, Cin, H, W), dtype=jnp.float32)
    fan_in = Cin * Ksz * Ksz
    w = jax.random.uniform(kw, (Cout, Cin, Ksz, Ksz), dtype=jnp.float32,
                           minval=-1.0, maxval=1.0) / jnp.sqrt(fan_in)
    b = jax.random.uniform(kb, (Cout,), dtype=jnp.float32,
                           minval=-1.0, maxval=1.0) / jnp.sqrt(fan_in)

    # Kernel runs without the bias (cancelled exactly by the InstanceNorm);
    # the f32 reference keeps it, validating the cancellation too.  Tolerance
    # is loosened vs. the all-f32 version because matmul operands are bf16.
    out = conv_bn_relu(x, w, b)
    out = jax.block_until_ready(out)

    ref = jax.block_until_ready(_reference(x, w, b))
    assert out.shape == (N, Cout, H, W)
    assert jnp.allclose(out, ref, atol=2e-2, rtol=2e-2), \
        float(jnp.max(jnp.abs(out - ref)))
    print("KERNEL_OK")
</pallas_src>

<mosaic_0001>
module attributes {stable_mosaic.version = 11 : i64} {
  func.func @conv_in_relu_kernel(%arg0: i32, %arg1: memref<1x16x256xbf16, #tpu.memory_space<vmem>>, %arg2: memref<8x144xbf16, #tpu.memory_space<vmem>>, %arg3: memref<1x8x256xf32, #tpu.memory_space<vmem>>, %arg4: memref<1x16x290xbf16, #tpu.memory_space<vmem>>, %arg5: memref<144x256xbf16, #tpu.memory_space<vmem>>) attributes {dimension_semantics = [#tpu.dimension_semantics<parallel>], iteration_bounds = array<i64: 2>, scalar_prefetch = 0 : i64, scratch_operands = 2 : i64, tpu.core_type = #tpu.core_type<tc>, window_params = [{transform_indices = @transform_0, window_bounds = array<i64: 1, 16, 256>}, {pipeline_mode = #tpu.pipeline_mode<synchronous>, transform_indices = @transform_1, window_bounds = array<i64: 8, 144>}, {transform_indices = @transform_2, window_bounds = array<i64: 1, 8, 256>}]} {
    %cst = arith.constant 0.000000e+00 : bf16
    %0 = vector.broadcast %cst : bf16 to vector<1x16x17xbf16>
    %c0 = arith.constant 0 : index
    %c0_0 = arith.constant 0 : index
    %c0_1 = arith.constant 0 : index
    %1 = vector.load %arg4[%c0, %c0_0, %c0_1] : memref<1x16x290xbf16, #tpu.memory_space<vmem>>, vector<1x16x17xbf16>
    tpu.vector_store %arg4[%c0, %c0_0, %c0_1], %0 {strides = array<i32>} : memref<1x16x290xbf16, #tpu.memory_space<vmem>>, vector<1x16x17xbf16>,
    %cst_2 = arith.constant 0.000000e+00 : bf16
    %2 = vector.broadcast %cst_2 : bf16 to vector<1x16x17xbf16>
    %c0_3 = arith.constant 0 : index
    %c0_4 = arith.constant 0 : index
    %c273 = arith.constant 273 : index
    %3 = vector.load %arg4[%c0_3, %c0_4, %c273] : memref<1x16x290xbf16, #tpu.memory_space<vmem>>, vector<1x16x17xbf16>
    tpu.vector_store %arg4[%c0_3, %c0_4, %c273], %2 {strides = array<i32>} : memref<1x16x290xbf16, #tpu.memory_space<vmem>>, vector<1x16x17xbf16>,
    %c0_5 = arith.constant 0 : index
    %c0_6 = arith.constant 0 : index
    %c0_7 = arith.constant 0 : index
    %4 = vector.load %arg1[%c0_5, %c0_6, %c0_7] : memref<1x16x256xbf16, #tpu.memory_space<vmem>>, vector<1x16x256xbf16>
    %c0_8 = arith.constant 0 : index
    %c0_9 = arith.constant 0 : index
    %c17 = arith.constant 17 : index
    %5 = vector.load %arg4[%c0_8, %c0_9, %c17] : memref<1x16x290xbf16, #tpu.memory_space<vmem>>, vector<1x16x256xbf16>
    tpu.vector_store %arg4[%c0_8, %c0_9, %c17], %4 {strides = array<i32>} : memref<1x16x290xbf16, #tpu.memory_space<vmem>>, vector<1x16x256xbf16>,
    %6 = tpu.iota {dimensions = array<i32: 1>} : vector<1x256xi32>
    %c16_i32 = arith.constant 16 : i32
    %c0_i32 = arith.constant 0 : i32
    %7 = arith.cmpi eq, %c16_i32, %c0_i32 : i32
    %c1_i32 = arith.constant 1 : i32
    %8 = arith.select %7, %c1_i32, %c16_i32 : i32
    %9 = vector.broadcast %8 : i32 to vector<1x256xi32>
    %10 = arith.remsi %6, %9 : vector<1x256xi32>
    %c0_i32_10 = arith.constant 0 : i32
    %11 = vector.broadcast %c0_i32_10 : i32 to vector<1x256xi32>
    %12 = arith.cmpi ne, %10, %11 : vector<1x256xi32>
    %c0_i32_11 = arith.constant 0 : i32
    %13 = vector.broadcast %c0_i32_11 : i32 to vector<1x256xi32>
    %14 = arith.cmpi slt, %10, %13 : vector<1x256xi32>
    %c0_i32_12 = arith.constant 0 : i32
    %15 = arith.cmpi slt, %8, %c0_i32_12 : i32
    %16 = vector.broadcast %15 : i1 to vector<1x256xi1>
    %17 = vector.broadcast %16 : vector<1x256xi1> to vector<1x256xi1>
    %18 = arith.xori %14, %17 : vector<1x256xi1>
    %19 = arith.andi %18, %12 : vector<1x256xi1>
    %20 = vector.broadcast %8 : i32 to vector<1x256xi32>
    %21 = arith.addi %10, %20 : vector<1x256xi32>
    %22 = arith.select %19, %21, %10 : vector<1x256xi1>, vector<1x256xi32>
    %c-1_i32 = arith.constant -1 : i32
    %23 = vector.broadcast %c-1_i32 : i32 to vector<1x256xi32>
    %24 = arith.addi %22, %23 : vector<1x256xi32>
    %c0_i32_13 = arith.constant 0 : i32
    %25 = vector.broadcast %c0_i32_13 : i32 to vector<1x256xi32>
    %26 = arith.cmpi sge, %24, %25 : vector<1x256xi32>
    %c-1_i32_14 = arith.constant -1 : i32
    %27 = vector.broadcast %c-1_i32_14 : i32 to vector<1x256xi32>
    %28 = arith.addi %22, %27 : vector<1x256xi32>
    %c16_i32_15 = arith.constant 16 : i32
    %29 = vector.broadcast %c16_i32_15 : i32 to vector<1x256xi32>
    %30 = arith.cmpi slt, %28, %29 : vector<1x256xi32>
    %31 = arith.andi %26, %30 : vector<1x256xi1>
    %c1_i32_16 = arith.constant 1 : i32
    %32 = vector.broadcast %c1_i32_16 : i32 to vector<1x256xi32>
    %33 = arith.addi %22, %32 : vector<1x256xi32>
    %c0_i32_17 = arith.constant 0 : i32
    %34 = vector.broadcast %c0_i32_17 : i32 to vector<1x256xi32>
    %35 = arith.cmpi sge, %33, %34 : vector<1x256xi32>
    %c1_i32_18 = arith.constant 1 : i32
    %36 = vector.broadcast %c1_i32_18 : i32 to vector<1x256xi32>
    %37 = arith.addi %22, %36 : vector<1x256xi32>
    %c16_i32_19 = arith.constant 16 : i32
    %38 = vector.broadcast %c16_i32_19 : i32 to vector<1x256xi32>
    %39 = arith.cmpi slt, %37, %38 : vector<1x256xi32>
    %40 = arith.andi %35, %39 : vector<1x256xi1>
    %c0_20 = arith.constant 0 : index
    %c0_21 = arith.constant 0 : index
    %c0_22 = arith.constant 0 : index
    %41 = vector.load %arg4[%c0_20, %c0_21, %c0_22] : memref<1x16x290xbf16, #tpu.memory_space<vmem>>, vector<1x16x256xbf16>
    %42 = vector.shape_cast %41 : vector<1x16x256xbf16> to vector<16x256xbf16>
    %cst_23 = arith.constant 0.000000e+00 : bf16
    %43 = vector.broadcast %cst_23 : bf16 to vector<16x256xbf16>
    %44 = vector.shape_cast %31 : vector<1x256xi1> to vector<1x256xi1>
    %45 = vector.broadcast %44 : vector<1x256xi1> to vector<16x256xi1>
    %46 = arith.select %45, %42, %43 : vector<16x256xi1>, vector<16x256xbf16>
    %c0_24 = arith.constant 0 : index
    %c0_25 = arith.constant 0 : index
    %47 = vector.load %arg5[%c0_24, %c0_25] : memref<144x256xbf16, #tpu.memory_space<vmem>>, vector<16x256xbf16>
    tpu.vector_store %arg5[%c0_24, %c0_25], %46 {strides = array<i32>} : memref<144x256xbf16, #tpu.memory_space<vmem>>, vector<16x256xbf16>,
    %c0_26 = arith.constant 0 : index
    %c0_27 = arith.constant 0 : index
    %c1 = arith.constant 1 : index
    %48 = vector.load %arg4[%c0_26, %c0_27, %c1] : memref<1x16x290xbf16, #tpu.memory_space<vmem>>, vector<1x16x256xbf16>
    %49 = vector.shape_cast %48 : vector<1x16x256xbf16> to vector<16x256xbf16>
    %c16 = arith.constant 16 : index
    %c0_28 = arith.constant 0 : index
    %50 = vector.load %arg5[%c16, %c0_28] : memref<144x256xbf16, #tpu.memory_space<vmem>>, vector<16x256xbf16>
    tpu.vector_store %arg5[%c16, %c0_28], %49 {strides = array<i32>} : memref<144x256xbf16, #tpu.memory_space<vmem>>, vector<16x256xbf16>,
    %c0_29 = arith.constant 0 : index
    %c0_30 = arith.constant 0 : index
    %c2 = arith.constant 2 : index
    %51 = vector.load %arg4[%c0_29, %c0_30, %c2] : memref<1x16x290xbf16, #tpu.memory_space<vmem>>, vector<1x16x256xbf16>
    %52 = vector.shape_cast %51 : vector<1x16x256xbf16> to vector<16x256xbf16>
    %cst_31 = arith.constant 0.000000e+00 : bf16
    %53 = vector.broadcast %cst_31 : bf16 to vector<16x256xbf16>
    %54 = vector.shape_cast %40 : vector<1x256xi1> to vector<1x256xi1>
    %55 = vector.broadcast %54 : vector<1x256xi1> to vector<16x256xi1>
    %56 = arith.select %55, %52, %53 : vector<16x256xi1>, vector<16x256xbf16>
    %c32 = arith.constant 32 : index
    %c0_32 = arith.constant 0 : index
    %57 = vector.load %arg5[%c32, %c0_32] : memref<144x256xbf16, #tpu.memory_space<vmem>>, vector<16x256xbf16>
    tpu.vector_store %arg5[%c32, %c0_32], %56 {strides = array<i32>} : memref<144x256xbf16, #tpu.memory_space<vmem>>, vector<16x256xbf16>,
    %c0_33 = arith.constant 0 : index
    %c0_34 = arith.constant 0 : index
    %c16_35 = arith.constant 16 : index
    %58 = vector.load %arg4[%c0_33, %c0_34, %c16_35] : memref<1x16x290xbf16, #tpu.memory_space<vmem>>, vector<1x16x256xbf16>
    %59 = vector.shape_cast %58 : vector<1x16x256xbf16> to vector<16x256xbf16>
    %cst_36 = arith.constant 0.000000e+00 : bf16
    %60 = vector.broadcast %cst_36 : bf16 to vector<16x256xbf16>
    %61 = vector.shape_cast %31 : vector<1x256xi1> to vector<1x256xi1>
    %62 = vector.broadcast %61 : vector<1x256xi1> to vector<16x256xi1>
    %63 = arith.select %62, %59, %60 : vector<16x256xi1>, vector<16x256xbf16>
    %c48 = arith.constant 48 : index
    %c0_37 = arith.constant 0 : index
    %64 = vector.load %arg5[%c48, %c0_37] : memref<144x256xbf16, #tpu.memory_space<vmem>>, vector<16x256xbf16>
    tpu.vector_store %arg5[%c48, %c0_37], %63 {strides = array<i32>} : memref<144x256xbf16, #tpu.memory_space<vmem>>, vector<16x256xbf16>,
    %c0_38 = arith.constant 0 : index
    %c0_39 = arith.constant 0 : index
    %c17_40 = arith.constant 17 : index
    %65 = vector.load %arg4[%c0_38, %c0_39, %c17_40] : memref<1x16x290xbf16, #tpu.memory_space<vmem>>, vector<1x16x256xbf16>
    %66 = vector.shape_cast %65 : vector<1x16x256xbf16> to vector<16x256xbf16>
    %c64 = arith.constant 64 : index
    %c0_41 = arith.constant 0 : index
    %67 = vector.load %arg5[%c64, %c0_41] : memref<144x256xbf16, #tpu.memory_space<vmem>>, vector<16x256xbf16>
    tpu.vector_store %arg5[%c64, %c0_41], %66 {strides = array<i32>} : memref<144x256xbf16, #tpu.memory_space<vmem>>, vector<16x256xbf16>,
    %c0_42 = arith.constant 0 : index
    %c0_43 = arith.constant 0 : index
    %c18 = arith.constant 18 : index
    %68 = vector.load %arg4[%c0_42, %c0_43, %c18] : memref<1x16x290xbf16, #tpu.memory_space<vmem>>, vector<1x16x256xbf16>
    %69 = vector.shape_cast %68 : vector<1x16x256xbf16> to vector<16x256xbf16>
    %cst_44 = arith.constant 0.000000e+00 : bf16
    %70 = vector.broadcast %cst_44 : bf16 to vector<16x256xbf16>
    %71 = vector.shape_cast %40 : vector<1x256xi1> to vector<1x256xi1>
    %72 = vector.broadcast %71 : vector<1x256xi1> to vector<16x256xi1>
    %73 = arith.select %72, %69, %70 : vector<16x256xi1>, vector<16x256xbf16>
    %c80 = arith.constant 80 : index
    %c0_45 = arith.constant 0 : index
    %74 = vector.load %arg5[%c80, %c0_45] : memref<144x256xbf16, #tpu.memory_space<vmem>>, vector<16x256xbf16>
    tpu.vector_store %arg5[%c80, %c0_45], %73 {strides = array<i32>} : memref<144x256xbf16, #tpu.memory_space<vmem>>, vector<16x256xbf16>,
    %c0_46 = arith.constant 0 : index
    %c0_47 = arith.constant 0 : index
    %c32_48 = arith.constant 32 : index
    %75 = vector.load %arg4[%c0_46, %c0_47, %c32_48] : memref<1x16x290xbf16, #tpu.memory_space<vmem>>, vector<1x16x256xbf16>
    %76 = vector.shape_cast %75 : vector<1x16x256xbf16> to vector<16x256xbf16>
    %cst_49 = arith.constant 0.000000e+00 : bf16
    %77 = vector.broadcast %cst_49 : bf16 to vector<16x256xbf16>
    %78 = vector.shape_cast %31 : vector<1x256xi1> to vector<1x256xi1>
    %79 = vector.broadcast %78 : vector<1x256xi1> to vector<16x256xi1>
    %80 = arith.select %79, %76, %77 : vector<16x256xi1>, vector<16x256xbf16>
    %c96 = arith.constant 96 : index
    %c0_50 = arith.constant 0 : index
    %81 = vector.load %arg5[%c96, %c0_50] : memref<144x256xbf16, #tpu.memory_space<vmem>>, vector<16x256xbf16>
    tpu.vector_store %arg5[%c96, %c0_50], %80 {strides = array<i32>} : memref<144x256xbf16, #tpu.memory_space<vmem>>, vector<16x256xbf16>,
    %c0_51 = arith.constant 0 : index
    %c0_52 = arith.constant 0 : index
    %c33 = arith.constant 33 : index
    %82 = vector.load %arg4[%c0_51, %c0_52, %c33] : memref<1x16x290xbf16, #tpu.memory_space<vmem>>, vector<1x16x256xbf16>
    %83 = vector.shape_cast %82 : vector<1x16x256xbf16> to vector<16x256xbf16>
    %c112 = arith.constant 112 : index
    %c0_53 = arith.constant 0 : index
    %84 = vector.load %arg5[%c112, %c0_53] : memref<144x256xbf16, #tpu.memory_space<vmem>>, vector<16x256xbf16>
    tpu.vector_store %arg5[%c112, %c0_53], %83 {strides = array<i32>} : memref<144x256xbf16, #tpu.memory_space<vmem>>, vector<16x256xbf16>,
    %c0_54 = arith.constant 0 : index
    %c0_55 = arith.constant 0 : index
    %c34 = arith.constant 34 : index
    %85 = vector.load %arg4[%c0_54, %c0_55, %c34] : memref<1x16x290xbf16, #tpu.memory_space<vmem>>, vector<1x16x256xbf16>
    %86 = vector.shape_cast %85 : vector<1x16x256xbf16> to vector<16x256xbf16>
    %cst_56 = arith.constant 0.000000e+00 : bf16
    %87 = vector.broadcast %cst_56 : bf16 to vector<16x256xbf16>
    %88 = vector.shape_cast %40 : vector<1x256xi1> to vector<1x256xi1>
    %89 = vector.broadcast %88 : vector<1x256xi1> to vector<16x256xi1>
    %90 = arith.select %89, %86, %87 : vector<16x256xi1>, vector<16x256xbf16>
    %c128 = arith.constant 128 : index
    %c0_57 = arith.constant 0 : index
    %91 = vector.load %arg5[%c128, %c0_57] : memref<144x256xbf16, #tpu.memory_space<vmem>>, vector<16x256xbf16>
    tpu.vector_store %arg5[%c128, %c0_57], %90 {strides = array<i32>} : memref<144x256xbf16, #tpu.memory_space<vmem>>, vector<16x256xbf16>,
    %c0_58 = arith.constant 0 : index
    %c0_59 = arith.constant 0 : index
    %92 = vector.load %arg2[%c0_58, %c0_59] : memref<8x144xbf16, #tpu.memory_space<vmem>>, vector<8x144xbf16>
    %c0_60 = arith.constant 0 : index
    %c0_61 = arith.constant 0 : index
    %93 = vector.load %arg5[%c0_60, %c0_61] : memref<144x256xbf16, #tpu.memory_space<vmem>>, vector<144x256xbf16>
    %cst_62 = arith.constant dense<0.000000e+00> : vector<8x256xf32>
    %94 = tpu.matmul %92, %93, %cst_62 {dimension_numbers = #tpu.dot_dimension_numbers<[1], [0], [0], [1], [0, 0, 1, 1], [], []>} : vector<8x144xbf16>, vector<144x256xbf16>, vector<8x256xf32> -> vector<8x256xf32>
    %cst_63 = arith.constant dense<0.000000e+00> : vector<8xf32>
    %95 = vector.multi_reduction <add>, %94, %cst_63 [1] : vector<8x256xf32> to vector<8xf32>
    %96 = vector.shape_cast %95 : vector<8xf32> to vector<8x1xf32>
    %cst_64 = arith.constant 3.906250e-03 : f32
    %97 = vector.broadcast %cst_64 : f32 to vector<8x1xf32>
    %98 = arith.mulf %96, %97 : vector<8x1xf32>
    %99 = arith.mulf %94, %94 : vector<8x256xf32>
    %cst_65 = arith.constant dense<0.000000e+00> : vector<8xf32>
    %100 = vector.multi_reduction <add>, %99, %cst_65 [1] : vector<8x256xf32> to vector<8xf32>
    %101 = vector.shape_cast %100 : vector<8xf32> to vector<8x1xf32>
    %cst_66 = arith.constant 3.906250e-03 : f32
    %102 = vector.broadcast %cst_66 : f32 to vector<8x1xf32>
    %103 = arith.mulf %101, %102 : vector<8x1xf32>
    %104 = arith.mulf %98, %98 : vector<8x1xf32>
    %105 = arith.subf %103, %104 : vector<8x1xf32>
    %106 = vector.broadcast %98 : vector<8x1xf32> to vector<8x256xf32>
    %107 = arith.subf %94, %106 : vector<8x256xf32>
    %cst_67 = arith.constant 9.99999974E-6 : f32
    %108 = vector.broadcast %cst_67 : f32 to vector<8x1xf32>
    %109 = arith.addf %105, %108 : vector<8x1xf32>
    %110 = math.rsqrt %109 : vector<8x1xf32>
    %111 = vector.broadcast %110 : vector<8x1xf32> to vector<8x256xf32>
    %112 = arith.mulf %107, %111 : vector<8x256xf32>
    %cst_68 = arith.constant 0.000000e+00 : f32
    %113 = vector.broadcast %cst_68 : f32 to vector<8x256xf32>
    %114 = arith.maximumf %112, %113 : vector<8x256xf32>
    %c0_69 = arith.constant 0 : index
    %c0_70 = arith.constant 0 : index
    %c0_71 = arith.constant 0 : index
    %115 = vector.load %arg3[%c0_69, %c0_70, %c0_71] : memref<1x8x256xf32, #tpu.memory_space<vmem>>, vector<1x8x256xf32>
    %116 = vector.shape_cast %115 : vector<1x8x256xf32> to vector<8x256xf32>
    %117 = vector.shape_cast %114 : vector<8x256xf32> to vector<1x8x256xf32>
    tpu.vector_store %arg3[%c0_69, %c0_70, %c0_71], %117 {strides = array<i32>} : memref<1x8x256xf32, #tpu.memory_space<vmem>>, vector<1x8x256xf32>,
    return
  }
  func.func @transform_0(%arg0: i32) -> (i32, i32, i32) {
    %c0_i32 = arith.constant 0 : i32
    %c0_i32_0 = arith.constant 0 : i32
    %c0_i32_1 = arith.constant 0 : i32
    return %arg0, %c0_i32, %c0_i32_0 : i32, i32, i32
  }
  func.func @transform_1(%arg0: i32) -> (i32, i32) {
    %c0_i32 = arith.constant 0 : i32
    %c0_i32_0 = arith.constant 0 : i32
    %c0_i32_1 = arith.constant 0 : i32
    return %c0_i32, %c0_i32_0 : i32, i32
  }
  func.func @transform_2(%arg0: i32) -> (i32, i32, i32) {
    %c0_i32 = arith.constant 0 : i32
    %c0_i32_0 = arith.constant 0 : i32
    %c0_i32_1 = arith.constant 0 : i32
    return %arg0, %c0_i32, %c0_i32_0 : i32, i32, i32
  }
}

</mosaic_0001>

<llo_original>
// kernel: tpu_custom_call.1
$region0: #{tpu_custom_call.1}
  #allocation0 [shape = 'u32[]', space=smem, size = 0x4, offset = 0x4, fixed_abs, tag = 'smem constant byte address 0x4 - core index']
  #allocation1 [shape = 'u32[144,128]{1,0:T(1,128)}', space=vmem, size = 0x12000, scoped, tag = 'internal scratch']
  #allocation2 [shape = 'bf16[1,16,290]{2,1,0:T(16,128)(2,1)}', space=vmem, size = 0x3000, scoped, tag = 'scratch operand']
  #allocation3 [shape = 'bf16[144,256]{1,0:T(16,128)(2,1)}', space=vmem, size = 0x12000, scoped, tag = 'scratch operand']
  %s0 = inlined_call_operand.hbm [shape: bf16[2,16,256], index: 0, kind: input, shape index: {}]
  %s1 = inlined_call_operand.hbm [shape: bf16[8,144], index: 1, kind: input, shape index: {}]
  %s2 = inlined_call_operand.hbm [shape: f32[2,8,256], index: 2, kind: output, shape index: {}]
  %s3 = sld [smem:[#allocation0]]
  $region49: #{tpu_custom_call.1} parent=0
    _
  %s5 = ssub.s32 1, %s3
  %s6 = scalar_select 0, %s5, %s3
  $region1: #{tpu_custom_call.1} parent=0
    #allocation4 [shape = 'u8[16384]{0}', space=vmem, size = 0x4000, scoped, tag = 'input window, operand 0']
    #allocation5 [shape = 's32[2]{0}', space=sflag, size = 0x8, scoped, tag = 'scoped memory for tpu_custom_call.1']
    #allocation6 [shape = 's32[2]{0}', space=sflag, size = 0x8, scoped, tag = 'scoped memory for tpu_custom_call.1']
    #allocation7 [shape = 'u8[4096]{0}', space=vmem, size = 0x1000, scoped, tag = 'input window, operand 1, single buffered']
    #allocation8 [shape = 's32[1]{0}', space=sflag, size = 0x4, scoped, tag = 'scoped memory for tpu_custom_call.1']
    #allocation9 [shape = 'u8[16384]{0}', space=vmem, size = 0x4000, scoped, tag = 'output window, operand 0']
    %7 = vsyncpa [#allocation5], 0
    %s8 = scalar_lea.sflag [#allocation5], 1
    %9 = vsyncpa %s8, 0
    %10 = vsyncpa [#allocation8], 0
    %11 = vsyncpa [#allocation6], 0
    %s12 = scalar_lea.sflag [#allocation6], 1
    %13 = vsyncpa %s12, 0
    loop: start=0, step=1, limit=4
    $region2: #{tpu_custom_call.1} parent=1 // loop_pre_header
      _
    $region3: #{tpu_custom_call.1} parent=1 // loop_header
      %s15 = sphi 0, %s19
      %p16 = scmp.ge.s32.totalorder %s15, 4
      %s25 = sphi 0, %s27
      %s28 = sphi 0, %s25
      %s29 = sphi 0, %s28
      %s45 = sphi 0, %s29
      %s49 = sphi 0, %s49
      %s51 = sphi 0, %s49
      %s52 = sphi 0, %s51
      %s66 = sphi 0, %s52
      %s72 = sphi 0, %s74
      %s75 = sphi 0, %s72
      %s76 = sphi 0, %s75
      %s92 = sphi 0, %s76
    $region4: #{tpu_custom_call.1} parent=1 // loop_header_branch
      %18 = sbr.rel (%p16) target = $region8
    $region5: #{tpu_custom_call.1} parent=1 // loop_body
      %s20 = ssub.s32 %s15, 1
      %s21 = ssub.s32 %s15, 2
      %s22 = sadd.s32 %s15, 1
      %s23 = ssub.s32 %s15, %s22
      %p24 = scmp.eq.s32.totalorder %s23, 0
      %s26 = sadd.s32 %s25, 1
      %s27 = scalar_select %p24, %s25, %s26
      %p30 = pneg %p24
      %p31 = scmp.eq.s32.totalorder %s15, 1
      %p32 = por %p30, %p31
      %p33 = scmp.ne.s32.totalorder %s25, %s28
      %p34 = scmp.eq.s32.totalorder %s15, 0
      %p35 = por %p33, %p34
      %p36 = scmp.ne.s32.totalorder %s25, %s28
      %p37 = scmp.eq.s32.totalorder %s20, 1
      %p38 = por %p36, %p37
      %p39 = scmp.ne.s32.totalorder %s28, %s29
      %p40 = scmp.eq.s32.totalorder %s20, 0
      %p41 = por %p39, %p40
      %p42 = scmp.ne.s32.totalorder %s28, %s29
      %p43 = scmp.eq.s32.totalorder %s21, 1
      %p44 = por %p42, %p43
      %p46 = scmp.ne.s32.totalorder %s29, %s45
      %p47 = scmp.eq.s32.totalorder %s21, 0
      %p48 = por %p46, %p47
      %s50 = sadd.s32 %s49, 1
      %p53 = scmp.eq.s32.totalorder %s15, 1
      %p54 = scmp.ne.s32.totalorder %s49, %s51
      %p55 = scmp.eq.s32.totalorder %s15, 0
      %p56 = por %p54, %p55
      %p57 = scmp.ne.s32.totalorder %s49, %s51
      %p58 = scmp.eq.s32.totalorder %s20, 1
      %p59 = por %p57, %p58
      %p60 = scmp.ne.s32.totalorder %s51, %s52
      %p61 = scmp.eq.s32.totalorder %s20, 0
      %p62 = por %p60, %p61
      %p63 = scmp.ne.s32.totalorder %s51, %s52
      %p64 = scmp.eq.s32.totalorder %s21, 1
      %p65 = por %p63, %p64
      %p67 = scmp.ne.s32.totalorder %s52, %s66
      %p68 = scmp.eq.s32.totalorder %s21, 0
      %p69 = por %p67, %p68
      %s70 = ssub.s32 %s15, %s22
      %p71 = scmp.eq.s32.totalorder %s70, 0
      %s73 = sadd.s32 %s72, 1
      %s74 = scalar_select %p71, %s72, %s73
      %p77 = pneg %p71
      %p78 = scmp.eq.s32.totalorder %s15, 1
      %p79 = por %p77, %p78
      %p80 = scmp.ne.s32.totalorder %s72, %s75
      %p81 = scmp.eq.s32.totalorder %s15, 0
      %p82 = por %p80, %p81
      %p83 = scmp.ne.s32.totalorder %s72, %s75
      %p84 = scmp.eq.s32.totalorder %s20, 1
      %p85 = por %p83, %p84
      %p86 = scmp.ne.s32.totalorder %s75, %s76
      %p87 = scmp.eq.s32.totalorder %s20, 0
      %p88 = por %p86, %p87
      %p89 = scmp.ne.s32.totalorder %s75, %s76
      %p90 = scmp.eq.s32.totalorder %s21, 1
      %p91 = por %p89, %p90
      %p93 = scmp.ne.s32.totalorder %s76, %s92
      %p94 = scmp.eq.s32.totalorder %s21, 0
      %p95 = por %p93, %p94
      %p96 = scmp.le.s32.totalorder 1, %s15
      %p97 = scmp.lt.s32.totalorder %s15, 3
      %p98 = pnand %p96, %p97
      %p99 = pneg %p98
      // Predicated region
      $region9: #{tpu_custom_call.1} parent=5 // pred_check
        _
      $region10: #{tpu_custom_call.1} parent=5 // pred_check_branch
        %101 = sbr.rel (%p98) target = $region12
      $region11: #{tpu_custom_call.1} parent=5 // pred_region
        %s102 = ssub.s32 %s15, 1
        // Predicated region
        $region13: #{tpu_custom_call.1} parent=11 // pred_check
          %p103 = pneg %p62
        $region14: #{tpu_custom_call.1} parent=11 // pred_check_branch
          %105 = sbr.rel (%p103) target = $region16
        $region15: #{tpu_custom_call.1} parent=11 // pred_region
          %s107 = ssub.s32 128, 128
          %108 = vsyncadd [#allocation8], %s107
          %s110 = sshll.u32 [#allocation7], 4
          %s111 = int_to_ptr.vmem [resolvable:$true] %s110
          %113 = dma.hbm_to_vmem [thread:$0]  %s1, 128, %s111, [#allocation8]
        $region16: #{tpu_custom_call.1} parent=11 // pred_fallthru
          _
      $region12: #{tpu_custom_call.1} parent=5 // pred_fallthru
        _
      %p114 = scmp.lt.s32.totalorder %s15, 2
      // Predicated region
      $region17: #{tpu_custom_call.1} parent=5 // pred_check
        %p115 = pneg %p114
      $region18: #{tpu_custom_call.1} parent=5 // pred_check_branch
        %117 = sbr.rel (%p115) target = $region20
      $region19: #{tpu_custom_call.1} parent=5 // pred_region
        // Predicated region
        $region21: #{tpu_custom_call.1} parent=19 // pred_check
          %p118 = pneg %p35
        $region22: #{tpu_custom_call.1} parent=19 // pred_check_branch
          %120 = sbr.rel (%p118) target = $region24
        $region23: #{tpu_custom_call.1} parent=19 // pred_region
          %s121 = sand.u32 %s25, 1
          %s122 = scalar_lea.sflag [#allocation5], %s121
          %s123 = sand.u32 %s25, 1
          %s124 = smul.addr %s123, 16
          %s125 = scalar_lea.vmem [#allocation4], %s124
          %s127 = ssub.s32 256, 256
          %128 = vsyncadd %s122, %s127
          %s129 = smul.addr %s15, 4
          %s130 = smul.addr %s129, 64
          %s131 = scalar_lea.hbm %s0, %s130
          %s132 = sshll.u32 %s125, 4
          %s133 = int_to_ptr.vmem [resolvable:$true] %s132
          %138 = dma.hbm_to_vmem [thread:$0]  %s131, 256, %s133, %s122, 128, 128, 8
        $region24: #{tpu_custom_call.1} parent=19 // pred_fallthru
          _
      $region20: #{tpu_custom_call.1} parent=5 // pred_fallthru
        _
      %p139 = scmp.le.s32.totalorder 1, %s15
      %p140 = scmp.lt.s32.totalorder %s15, 3
      %p141 = pnand %p139, %p140
      %p142 = pneg %p141
      // Predicated region
      $region25: #{tpu_custom_call.1} parent=5 // pred_check
        _
      $region26: #{tpu_custom_call.1} parent=5 // pred_check_branch
        %144 = sbr.rel (%p141) target = $region28
      $region27: #{tpu_custom_call.1} parent=5 // pred_region
        %s145 = ssub.s32 %s15, 1
        %s146 = sand.u32 %s28, 1
        %s147 = scalar_lea.sflag [#allocation5], %s146
        %s148 = sand.u32 %s28, 1
        %s149 = smul.addr %s148, 16
        %s150 = scalar_lea.vmem [#allocation4], %s149
        // Predicated region
        $region29: #{tpu_custom_call.1} parent=27 // pred_check
          %p151 = pneg %p41
        $region30: #{tpu_custom_call.1} parent=27 // pred_check_branch
          %153 = sbr.rel (%p151) target = $region32
        $region31: #{tpu_custom_call.1} parent=27 // pred_region
          %154 = dma.done %s147, 256
        $region32: #{tpu_custom_call.1} parent=27 // pred_fallthru
          _
        // Predicated region
        $region33: #{tpu_custom_call.1} parent=27 // pred_check
          %p155 = pneg %p62
        $region34: #{tpu_custom_call.1} parent=27 // pred_check_branch
          %157 = sbr.rel (%p155) target = $region36
        $region35: #{tpu_custom_call.1} parent=27 // pred_region
          %158 = dma.done [#allocation8], 128
        $region36: #{tpu_custom_call.1} parent=27 // pred_fallthru
          _
        %s159 = sand.u32 %s28, 1
        %s160 = scalar_lea.sflag [#allocation5], %s159
        %s161 = sand.u32 %s28, 1
        %s162 = smul.addr %s161, 16
        %s163 = scalar_lea.vmem [#allocation4], %s162
        %p164 = pneg %p41
        %p165 = pneg %p38
        %p166 = pneg %p62
        %p167 = pneg %p59
        %p168 = pneg %p88
        %p169 = pneg %p85
        %s170 = sand.u32 %s75, 1
        %s171 = scalar_lea.sflag [#allocation6], %s170
        %s172 = sand.u32 %s75, 1
        %s173 = smul.addr %s172, 16
        %s174 = scalar_lea.vmem [#allocation9], %s173
        %vm178 = vcmask 138240
        %179 = vst.msk [vmem:[#allocation2] sm:$0xff] %vm178, 0
        %vm180 = vcmask 277640
        %181 = vst.msk [vmem:[#allocation2 + $0x10] sm:$0xff] %vm180, 0
        %v182 = vld [vmem:[%s150] sm:$0xff]
        %v183 = vld [vmem:[%s150 + $0x8] sm:$0xff]
        %v186 = vunpack.c.l.b16 %v182
        %v187 = vunpack.c.h.b16 %v182
        %v188 = vunpack.c.l.b16 %v183
        %v189 = vunpack.c.h.b16 %v183
        %v190 = vpack.c.b16 %v188, %v186
        %v191 = vpack.c.b16 %v189, %v187
        %192 = vrot.lane.b32.xlu0 %v190, 17
        %v193 = vpop.permute.xlu0 %192
        %194 = vrot.lane.b32.xlu0 %v191, 17
        %v195 = vpop.permute.xlu0 %194
        %vm196 = vcmask 138240
        %v197 = vsel %vm196, %v193, %v195
        %vm201 = vcmask 1047688
        %202 = vst.msk [vmem:[#allocation2] sm:$0xff] %vm201, %v193
        %203 = vst [vmem:[#allocation2 + $0x8] sm:$0xff] %v197
        %204 = vst.msk [vmem:[#allocation2 + $0x10] sm:$0xff] %vm178, %v195
        %v205 = vlaneseq
        %v206 = vand.u32 %v205, 127
        %v207 = vadd.s32 %v206, 128
        %vm208 = vcmp.lt.s32.totalorder %v206, 0
        %v209 = vsub.s32 0, %v206
        %v210 = vsel %vm208, %v209, %v206
        %v211 = vshrl.u32 %v210, 4
        %v212 = vand.u32 %v210, 15
        %v213 = vsub.s32 0, %v212
        %v214 = vsel %vm208, %v213, %v212
        %vm215 = vcmp.lt.s32.totalorder %v207, 0
        %v216 = vsub.s32 0, %v207
        %v217 = vsel %vm215, %v216, %v207
        %v218 = vshrl.u32 %v217, 4
        %v219 = vand.u32 %v217, 15
        %v220 = vsub.s32 0, %v219
        %v221 = vsel %vm215, %v220, %v219
        %vm222 = vcmp.ne.s32.totalorder %v214, 0
        %vm223 = vcmp.ne.s32.totalorder %v221, 0
        %vm224 = vcmp.lt.s32.totalorder %v214, 0
        %vm225 = vcmp.lt.s32.totalorder %v221, 0
        %vm226 = vmand %vm224, %vm222
        %vm227 = vmand %vm225, %vm223
        %v228 = vadd.s32 %v214, 16
        %v229 = vadd.s32 %v221, 16
        %v230 = vsel %vm226, %v228, %v214
        %v231 = vsel %vm227, %v229, %v221
        %v232 = vadd.s32 %v230, 4294967295
        %v233 = vadd.s32 %v231, 4294967295
        %vm234 = vcmp.ge.s32.totalorder %v232, 0
        %vm235 = vcmp.ge.s32.totalorder %v233, 0
        %vm236 = vcmp.lt.s32.totalorder %v232, 16
        %vm237 = vcmp.lt.s32.totalorder %v233, 16
        %vm238 = vmand %vm234, %vm236
        %vm239 = vmand %vm235, %vm237
        %v240 = vadd.s32 %v230, 1
        %v241 = vadd.s32 %v231, 1
        %vm242 = vcmp.ge.s32.totalorder %v240, 0
        %vm243 = vcmp.ge.s32.totalorder %v241, 0
        %vm244 = vcmp.lt.s32.totalorder %v240, 16
        %vm245 = vcmp.lt.s32.totalorder %v241, 16
        %vm246 = vmand %vm242, %vm244
        %vm247 = vmand %vm243, %vm245
        %v248 = vld [vmem:[#allocation2] sm:$0xff]
        %v249 = vld [vmem:[#allocation2 + $0x8] sm:$0xff]
        %v250 = vsel %vm238, 1, 0
        %v251 = vsel %vm239, 1, 0
        %vm252 = vcmp.eq.s32.totalorder %v250, 1
        %vm253 = vcmp.eq.s32.totalorder %v251, 1
        %vm254 = vmpackc.low %vm253, %vm252
        %v255 = vsel %vm254, 65537, 0
        %v256 = vlaneseq
        %v257 = vshrl.u32 %v256, 7
        %v258 = vsub.s32 0, %v257
        %v259 = vrot.slane %v255, %v258
        %v260 = vlaneseq
        %v261 = vshrl.u32 %v260, 7
        %v262 = vsub.s32 4, %v261
        %v263 = vrot.slane %v255, %v262
        %vm264 = vcmp.ne.s16.totalorder %v259, 0
        %vm265 = vcmp.ne.s16.totalorder %v263, 0
        %v266 = vsel %vm264, %v248, 0
        %v267 = vsel %vm265, %v249, 0
        %268 = vst [vmem:[#allocation3] sm:$0xff] %v266
        %269 = vst [vmem:[#allocation3 + $0x8] sm:$0xff] %v267
        %v270 = vld [vmem:[#allocation2] sm:$0xff]
        %v271 = vld [vmem:[#allocation2 + $0x8] sm:$0xff]
        %v272 = vld [vmem:[#allocation2 + $0x10] sm:$0xff]
        %276 = vrot.lane.b32.xlu0 %v270, 127
        %v277 = vpop.permute.xlu0 %276
        %278 = vrot.lane.b32.xlu0 %v271, 127
        %v279 = vpop.permute.xlu0 %278
        %280 = vrot.lane.b32.xlu0 %v272, 127
        %v281 = vpop.permute.xlu0 %280
        %vm282 = vcmask 1039360
        %v283 = vsel %vm282, %v277, %v279
        %v284 = vsel %vm282, %v279, %v281
        %287 = vst [vmem:[#allocation3 + $0x10] sm:$0xff] %v283
        %288 = vst [vmem:[#allocation3 + $0x18] sm:$0xff] %v284
        %v289 = vld [vmem:[#allocation2] sm:$0xff]
        %v290 = vld [vmem:[#allocation2 + $0x8] sm:$0xff]
        %v291 = vld [vmem:[#allocation2 + $0x10] sm:$0xff]
        %v292 = vsel %vm246, 1, 0
        %v293 = vsel %vm247, 1, 0
        %vm294 = vcmp.eq.s32.totalorder %v292, 1
        %vm295 = vcmp.eq.s32.totalorder %v293, 1
        %vm296 = vmpackc.low %vm295, %vm294
        %v297 = vsel %vm296, 65537, 0
        %v298 = vlaneseq
        %v299 = vshrl.u32 %v298, 7
        %v300 = vsub.s32 0, %v299
        %v301 = vrot.slane %v297, %v300
        %v302 = vlaneseq
        %v303 = vshrl.u32 %v302, 7
        %v304 = vsub.s32 4, %v303
        %v305 = vrot.slane %v297, %v304
        %306 = vrot.lane.b32.xlu0 %v301, 2
        %v307 = vpop.permute.xlu0 %306
        %308 = vrot.lane.b32.xlu0 %v305, 2
        %v309 = vpop.permute.xlu0 %308
        %vm310 = vcmask 15360
        %v311 = vsel %vm310, %v307, %v309
        %vm312 = vcmp.ne.s16.totalorder %v307, 0
        %vm313 = vcmp.ne.s16.totalorder %v311, 0
        %vm314 = vcmp.ne.s16.totalorder %v309, 0
        %v315 = vsel %vm312, %v289, 0
        %v316 = vsel %vm313, %v290, 0
        %v317 = vsel %vm314, %v291, 0
        %321 = vrot.lane.b32.xlu0 %v315, 126
        %v322 = vpop.permute.xlu0 %321
        %323 = vrot.lane.b32.xlu0 %v316, 126
        %v324 = vpop.permute.xlu0 %323
        %325 = vrot.lane.b32.xlu0 %v317, 126
        %v326 = vpop.permute.xlu0 %325
        %vm327 = vcmask 1031168
        %v328 = vsel %vm327, %v322, %v324
        %v329 = vsel %vm327, %v324, %v326
        %332 = vst [vmem:[#allocation3 + $0x20] sm:$0xff] %v328
        %333 = vst [vmem:[#allocation3 + $0x28] sm:$0xff] %v329
        %v334 = vld [vmem:[#allocation2] sm:$0xff]
        %v335 = vld [vmem:[#allocation2 + $0x8] sm:$0xff]
        %v336 = vld [vmem:[#allocation2 + $0x10] sm:$0xff]
        %337 = vrot.lane.b32.xlu0 %v259, 16
        %v338 = vpop.permute.xlu0 %337
        %339 = vrot.lane.b32.xlu0 %v263, 16
        %v340 = vpop.permute.xlu0 %339
        %vm341 = vcmask 130048
        %v342 = vsel %vm341, %v338, %v340
        %vm343 = vcmp.ne.s16.totalorder %v338, 0
        %vm344 = vcmp.ne.s16.totalorder %v342, 0
        %vm345 = vcmp.ne.s16.totalorder %v340, 0
        %v346 = vsel %vm343, %v334, 0
        %v347 = vsel %vm344, %v335, 0
        %v348 = vsel %vm345, %v336, 0
        %352 = vrot.lane.b32.xlu0 %v346, 112
        %v353 = vpop.permute.xlu0 %352
        %354 = vrot.lane.b32.xlu0 %v347, 112
        %v355 = vpop.permute.xlu0 %354
        %356 = vrot.lane.b32.xlu0 %v348, 112
        %v357 = vpop.permute.xlu0 %356
        %vm358 = vcmask 916480
        %v359 = vsel %vm358, %v353, %v355
        %v360 = vsel %vm358, %v355, %v357
        %363 = vst [vmem:[#allocation3 + $0x30] sm:$0xff] %v359
        %364 = vst [vmem:[#allocation3 + $0x38] sm:$0xff] %v360
        %v365 = vld [vmem:[#allocation2] sm:$0xff]
        %v366 = vld [vmem:[#allocation2 + $0x8] sm:$0xff]
        %v367 = vld [vmem:[#allocation2 + $0x10] sm:$0xff]
        %371 = vrot.lane.b32.xlu0 %v365, 111
        %v372 = vpop.permute.xlu0 %371
        %373 = vrot.lane.b32.xlu0 %v366, 111
        %v374 = vpop.permute.xlu0 %373
        %375 = vrot.lane.b32.xlu0 %v367, 111
        %v376 = vpop.permute.xlu0 %375
        %vm377 = vcmask 908288
        %v378 = vsel %vm377, %v372, %v374
        %v379 = vsel %vm377, %v374, %v376
        %382 = vst [vmem:[#allocation3 + $0x40] sm:$0xff] %v378
        %383 = vst [vmem:[#allocation3 + $0x48] sm:$0xff] %v379
        %v384 = vld [vmem:[#allocation2] sm:$0xff]
        %v385 = vld [vmem:[#allocation2 + $0x8] sm:$0xff]
        %v386 = vld [vmem:[#allocation2 + $0x10] sm:$0xff]
        %387 = vrot.lane.b32.xlu0 %v301, 18
        %v388 = vpop.permute.xlu0 %387
        %389 = vrot.lane.b32.xlu0 %v305, 18
        %v390 = vpop.permute.xlu0 %389
        %vm391 = vcmask 146432
        %v392 = vsel %vm391, %v388, %v390
        %vm393 = vcmp.ne.s16.totalorder %v388, 0
        %vm394 = vcmp.ne.s16.totalorder %v392, 0
        %vm395 = vcmp.ne.s16.totalorder %v390, 0
        %v396 = vsel %vm393, %v384, 0
        %v397 = vsel %vm394, %v385, 0
        %v398 = vsel %vm395, %v386, 0
        %402 = vrot.lane.b32.xlu0 %v396, 110
        %v403 = vpop.permute.xlu0 %402
        %404 = vrot.lane.b32.xlu0 %v397, 110
        %v405 = vpop.permute.xlu0 %404
        %406 = vrot.lane.b32.xlu0 %v398, 110
        %v407 = vpop.permute.xlu0 %406
        %vm408 = vcmask 900096
        %v409 = vsel %vm408, %v403, %v405
        %v410 = vsel %vm408, %v405, %v407
        %413 = vst [vmem:[#allocation3 + $0x50] sm:$0xff] %v409
        %414 = vst [vmem:[#allocation3 + $0x58] sm:$0xff] %v410
        %v415 = vld [vmem:[#allocation2] sm:$0xff]
        %v416 = vld [vmem:[#allocation2 + $0x8] sm:$0xff]
        %v417 = vld [vmem:[#allocation2 + $0x10] sm:$0xff]
        %418 = vrot.lane.b32.xlu0 %v259, 32
        %v419 = vpop.permute.xlu0 %418
        %420 = vrot.lane.b32.xlu0 %v263, 32
        %v421 = vpop.permute.xlu0 %420
        %vm422 = vcmask 261120
        %v423 = vsel %vm422, %v419, %v421
        %vm424 = vcmp.ne.s16.totalorder %v419, 0
        %vm425 = vcmp.ne.s16.totalorder %v423, 0
        %vm426 = vcmp.ne.s16.totalorder %v421, 0
        %v427 = vsel %vm424, %v415, 0
        %v428 = vsel %vm425, %v416, 0
        %v429 = vsel %vm426, %v417, 0
        %433 = vrot.lane.b32.xlu0 %v427, 96
        %v434 = vpop.permute.xlu0 %433
        %435 = vrot.lane.b32.xlu0 %v428, 96
        %v436 = vpop.permute.xlu0 %435
        %437 = vrot.lane.b32.xlu0 %v429, 96
        %v438 = vpop.permute.xlu0 %437
        %vm439 = vcmask 785408
        %v440 = vsel %vm439, %v434, %v436
        %v441 = vsel %vm439, %v436, %v438
        %444 = vst [vmem:[#allocation3 + $0x60] sm:$0xff] %v440
        %445 = vst [vmem:[#allocation3 + $0x68] sm:$0xff] %v441
        %v446 = vld [vmem:[#allocation2] sm:$0xff]
        %v447 = vld [vmem:[#allocation2 + $0x8] sm:$0xff]
        %v448 = vld [vmem:[#allocation2 + $0x10] sm:$0xff]
        %452 = vrot.lane.b32.xlu0 %v446, 95
        %v453 = vpop.permute.xlu0 %452
        %454 = vrot.lane.b32.xlu0 %v447, 95
        %v455 = vpop.permute.xlu0 %454
        %456 = vrot.lane.b32.xlu0 %v448, 95
        %v457 = vpop.permute.xlu0 %456
        %vm458 = vcmask 777216
        %v459 = vsel %vm458, %v453, %v455
        %v460 = vsel %vm458, %v455, %v457
        %463 = vst [vmem:[#allocation3 + $0x70] sm:$0xff] %v459
        %464 = vst [vmem:[#allocation3 + $0x78] sm:$0xff] %v460
        %v465 = vld [vmem:[#allocation2] sm:$0xff]
        %v466 = vld [vmem:[#allocation2 + $0x8] sm:$0xff]
        %v467 = vld [vmem:[#allocation2 + $0x10] sm:$0xff]
        %468 = vrot.lane.b32.xlu0 %v301, 34
        %v469 = vpop.permute.xlu0 %468
        %470 = vrot.lane.b32.xlu0 %v305, 34
        %v471 = vpop.permute.xlu0 %470
        %vm472 = vcmask 277504
        %v473 = vsel %vm472, %v469, %v471
        %vm474 = vcmp.ne.s16.totalorder %v469, 0
        %vm475 = vcmp.ne.s16.totalorder %v473, 0
        %vm476 = vcmp.ne.s16.totalorder %v471, 0
        %v477 = vsel %vm474, %v465, 0
        %v478 = vsel %vm475, %v466, 0
        %v479 = vsel %vm476, %v467, 0
        %483 = vrot.lane.b32.xlu0 %v477, 94
        %v484 = vpop.permute.xlu0 %483
        %485 = vrot.lane.b32.xlu0 %v478, 94
        %v486 = vpop.permute.xlu0 %485
        %487 = vrot.lane.b32.xlu0 %v479, 94
        %v488 = vpop.permute.xlu0 %487
        %vm489 = vcmask 769024
        %v490 = vsel %vm489, %v484, %v486
        %v491 = vsel %vm489, %v486, %v488
        %494 = vst [vmem:[#allocation3 + $0x80] sm:$0xff] %v490
        %495 = vst [vmem:[#allocation3 + $0x88] sm:$0xff] %v491
        %v496 = vld [vmem:[#allocation7] sm:$0xff]
        %v497 = vld [vmem:[#allocation3] sm:$0xff]
        %v498 = vld [vmem:[#allocation3 + $0x8] sm:$0xff]
        %v499 = vld [vmem:[#allocation3 + $0x10] sm:$0xff]
        %v500 = vld [vmem:[#allocation3 + $0x18] sm:$0xff]
        %v501 = vld [vmem:[#allocation3 + $0x20] sm:$0xff]
        %v502 = vld [vmem:[#allocation3 + $0x28] sm:$0xff]
        %v503 = vld [vmem:[#allocation3 + $0x30] sm:$0xff]
        %v504 = vld [vmem:[#allocation3 + $0x38] sm:$0xff]
        %v505 = vld [vmem:[#allocation3 + $0x40] sm:$0xff]
        %v506 = vld [vmem:[#allocation3 + $0x48] sm:$0xff]
        %v507 = vld [vmem:[#allocation3 + $0x50] sm:$0xff]
        %v508 = vld [vmem:[#allocation3 + $0x58] sm:$0xff]
        %v509 = vld [vmem:[#allocation3 + $0x60] sm:$0xff]
        %v510 = vld [vmem:[#allocation3 + $0x68] sm:$0xff]
        %v511 = vld [vmem:[#allocation3 + $0x70] sm:$0xff]
        %v512 = vld [vmem:[#allocation3 + $0x78] sm:$0xff]
        %v513 = vld [vmem:[#allocation3 + $0x80] sm:$0xff]
        %v514 = vld [vmem:[#allocation3 + $0x88] sm:$0xff]
        %v516 = vunpack.c.l.b16 %v496
        %v517 = vunpack.c.h.b16 %v496
        %v518 = vpack.c.b16 %v516, %v516
        %v519 = vpack.c.b16 %v517, %v517
        %vm521 = vcmask 130048
        %v523 = vsel %vm521, %v519, 0
        %525 = vmatprep.subr.bf16.mxu0 %v498
        %526 = vmatpush1.bf16.msra.mxu0 %v497
        %527 = vmatprep.subr.bf16.mxu0 %v500
        %528 = vmatpush1.bf16.msra.mxu0 %v499
        %529 = vmatprep.subr.bf16.mxu0 %v502
        %530 = vmatpush1.bf16.msra.mxu0 %v501
        %531 = vmatprep.subr.bf16.mxu0 %v504
        %532 = vmatpush1.bf16.msra.mxu0 %v503
        %533 = vmatprep.subr.bf16.mxu0 %v506
        %534 = vmatpush1.bf16.msra.mxu0 %v505
        %535 = vmatprep.subr.bf16.mxu0 %v508
        %536 = vmatpush1.bf16.msra.mxu0 %v507
        %537 = vmatprep.subr.bf16.mxu0 %v510
        %538 = vmatpush1.bf16.msra.mxu0 %v509
        %539 = vmatprep.subr.bf16.mxu0 %v512
        %540 = vmatpush1.bf16.msra.mxu0 %v511
        %541 = vmatprep.subr.bf16.mxu0 %v514
        %542 = vmatpush1.bf16.msra.mxu0 %v513
        %543 = vmatprep.subr.bf16.mxu0 0
        %544 = vmatpush1.bf16.msra.mxu0 0
        %545 = vmatprep.subr.bf16.mxu0 0
        %546 = vmatpush1.bf16.msra.mxu0 0
        %547 = vmatprep.subr.bf16.mxu0 0
        %548 = vmatpush1.bf16.msra.mxu0 0
        %549 = vmatprep.subr.bf16.mxu0 0
        %550 = vmatpush1.bf16.msra.mxu0 0
        %551 = vmatprep.subr.bf16.mxu0 0
        %552 = vmatpush1.bf16.msra.mxu0 0
        %553 = vmatprep.subr.bf16.mxu0 0
        %554 = vmatpush1.bf16.msra.mxu0 0
        %555 = vmatprep.subr.bf16.mxu0 0
        %556 = vmatpush1.bf16.msra.mxu0 0
        %557 = vmatprep.mubr.bf16.mxu0 %v523
        %558 = vmatmul.mubr.bf16.gmra.mrb[0].mxu0 %v518
        %v559 = vpop.f32.mrb[0].mxu0
        %v560 = vadd.f32 0.0, %v559
        %v561 = vpop.f32.mrb[0].mxu0
        %v562 = vadd.f32 0.0, %v561
        %v563 = vpop.f32.mrb[0].mxu0
        %v564 = vpop.f32.mrb[0].mxu0
        %565 = vdwg.mxu0
        %v566 = vadd.f32 %v560, %v562
        %567 = vadd.xlane.f32.xlu0 %v566
        %v568 = vpop.xlane.xlu0 %567
        %v569 = vmul.f32 %v568, 0.00390625
        %v570 = vmul.f32 %v560, %v560
        %v571 = vmul.f32 %v562, %v562
        %v572 = vadd.f32 %v570, %v571
        %573 = vadd.xlane.f32.xlu0 %v572
        %v574 = vpop.xlane.xlu0 %573
        %v575 = vmul.f32 %v574, 0.00390625
        %v576 = vmul.f32 %v569, %v569
        %v577 = vsub.f32 %v575, %v576
        %v578 = vsub.f32 %v560, %v569
        %v579 = vsub.f32 %v562, %v569
        %v580 = vadd.f32 %v577, 1e-05
        %v581 = vrsqrt.pop %v580
        %v582 = vmul.f32 %v578, %v581
        %v583 = vmul.f32 %v579, %v581
        %v584 = vmax.f32 %v582, 0.0
        %v585 = vmax.f32 %v583, 0.0
        %586 = vst [vmem:[%s174] sm:$0xff] %v584
        %587 = vst [vmem:[%s174 + $0x8] sm:$0xff] %v585
        %s588 = sand.u32 %s75, 1
        %s589 = scalar_lea.sflag [#allocation6], %s588
        %s590 = sand.u32 %s75, 1
        %s591 = smul.addr %s590, 16
        %s592 = scalar_lea.vmem [#allocation9], %s591
        // Predicated region
        $region37: #{tpu_custom_call.1} parent=27 // pred_check
          %p593 = pneg %p85
        $region38: #{tpu_custom_call.1} parent=27 // pred_check_branch
          %595 = sbr.rel (%p593) target = $region40
        $region39: #{tpu_custom_call.1} parent=27 // pred_region
          %s597 = ssub.s32 256, 256
          %598 = vsyncadd %s589, %s597
          %s599 = smul.addr %s20, 2
          %s600 = smul.addr %s599, 128
          %s601 = scalar_lea.hbm %s2, %s600
          %s603 = sshll.u32 %s592, 4
          %s604 = int_to_ptr.vmem [resolvable:$true] %s603
          %606 = dma.vmem_to_hbm [thread:$0]  %s604, 256, %s601, %s589
        $region40: #{tpu_custom_call.1} parent=27 // pred_fallthru
          _
      $region28: #{tpu_custom_call.1} parent=5 // pred_fallthru
        _
      %p607 = scmp.le.s32.totalorder 2, %s15
      // Predicated region
      $region41: #{tpu_custom_call.1} parent=5 // pred_check
        %p608 = pneg %p607
      $region42: #{tpu_custom_call.1} parent=5 // pred_check_branch
        %610 = sbr.rel (%p608) target = $region44
      $region43: #{tpu_custom_call.1} parent=5 // pred_region
        %s611 = ssub.s32 %s15, 2
        // Predicated region
        $region45: #{tpu_custom_call.1} parent=43 // pred_check
          %p612 = pneg %p91
        $region46: #{tpu_custom_call.1} parent=43 // pred_check_branch
          %614 = sbr.rel (%p612) target = $region48
        $region47: #{tpu_custom_call.1} parent=43 // pred_region
          %s615 = sand.u32 %s76, 1
          %s616 = scalar_lea.sflag [#allocation6], %s615
          %s617 = sand.u32 %s76, 1
          %s618 = smul.addr %s617, 16
          %s619 = scalar_lea.vmem [#allocation9], %s618
          %620 = dma.done %s616, 256
        $region48: #{tpu_custom_call.1} parent=43 // pred_fallthru
          _
      $region44: #{tpu_custom_call.1} parent=5 // pred_fallthru
        _
    $region6: #{tpu_custom_call.1} parent=1 // loop_footer
      %s19 = sadd.s32 1, %s15
    $region7: #{tpu_custom_call.1} parent=1 // loop_footer_branch
      %14 = sbr.rel target = $region3
    $region8: #{tpu_custom_call.1} parent=1 // loop_exit
      _
    %621 = vsyncpa [#allocation5], 1
    %s622 = scalar_lea.sflag [#allocation5], 1
    %623 = vsyncpa %s622, 1
    %624 = vsyncpa [#allocation8], 1
    %625 = vsyncpa [#allocation6], 1
    %s626 = scalar_lea.sflag [#allocation6], 1
    %627 = vsyncpa %s626, 1

</llo_original>
